<compile_context>
chip_gen: v6e
topology: v6e:2x2x1
jax: 0.10.0
libtpu: 0.0.40
codegen_flags: <defaults>
</compile_context>

<pallas_src>
import math
import jax
import jax.numpy as jnp
from jax.experimental import pallas as pl
from jax.experimental.pallas import tpu as pltpu


def _most_square_factors(input_features: int):
    """Mirror the factor-selection logic of the PyTorch ReshapeLayer.__init__."""
    factors = []
    for i in range(1, int(math.isqrt(input_features)) + 1):
        if input_features % i == 0:
            factors.append((i, input_features // i))
    if factors:
        factors.sort(key=lambda f: abs(f[0] - f[1]))
        return factors[0]
    return input_features, 1


# ----------------------------------------------------------------------------
# Primary path: zero-traffic aliased no-op kernel.
# ----------------------------------------------------------------------------
def _noop_kernel(x_ref, o_ref):
    # Pure view: the output buffer aliases the input buffer, so there is
    # nothing to move.  touch() pins a fake read/write dependency so the
    # aliased output is considered produced by this call.
    pltpu.touch(x_ref)
    pltpu.touch(o_ref)


def _alias_noop(x: jax.Array) -> jax.Array:
    return pl.pallas_call(
        _noop_kernel,
        out_shape=jax.ShapeDtypeStruct(x.shape, x.dtype),
        in_specs=[pl.BlockSpec(memory_space=pl.ANY)],
        out_specs=pl.BlockSpec(memory_space=pl.ANY),
        # Output buffer == input buffer.  NOTE: the alias only elides the copy
        # entirely if the caller donates x (jax.jit donate_argnums); otherwise
        # XLA inserts one defensive copy of x, which is still cheaper than the
        # explicit read+write copy kernel.
        input_output_aliases={0: 0},
        compiler_params=pltpu.CompilerParams(has_side_effects=True),
    )(x)


# ----------------------------------------------------------------------------
# Fallback path: HBM-bound tiled identity copy (only if the no-op can't lower).
# ----------------------------------------------------------------------------
def _copy_kernel(x_ref, o_ref):
    o_ref[...] = x_ref[...]


def _tiled_copy_2d(x2d: jax.Array) -> jax.Array:
    """Identity copy of a (R, C) slab; C is lane-dense (multiple of 128) or full."""
    R, C = x2d.shape
    dtype = x2d.dtype
    itemsize = jnp.dtype(dtype).itemsize
    sub = max(8, 32 // max(itemsize, 1))  # sublane rows per vreg: 8 f32 / 16 bf16 / 32 i8

    if R <= sub:
        tr = R  # full-dim block: always layout-legal, tiny footprint
    else:
        # ~4 MiB tiles amortize the ~0.35 us per-grid-step overhead; with
        # double-buffered in + out the residency is ~4x tile ~= 16 MiB.
        budget_rows = max(sub, (4 << 20) // max(C * itemsize, 1))
        tr = max(sub, (budget_rows // sub) * sub)
        tr = min(tr, (R // sub) * sub)
        # Ensure >= 2 grid steps when possible so v7x's two TensorCores both
        # get "parallel" work (no-op on single-TC v5e/v6e).
        if pl.cdiv(R, tr) < 2 and R >= 2 * sub:
            tr = max(sub, (tr // 2 // sub) * sub)

    grid = (pl.cdiv(R, tr),)
    total_bytes = R * C * itemsize
    return pl.pallas_call(
        _copy_kernel,
        out_shape=jax.ShapeDtypeStruct((R, C), dtype),
        grid=grid,
        in_specs=[pl.BlockSpec((tr, C), lambda i: (i, 0))],
        out_specs=pl.BlockSpec((tr, C), lambda i: (i, 0)),
        cost_estimate=pl.CostEstimate(
            flops=0, transcendentals=0, bytes_accessed=2 * total_bytes),
        compiler_params=pltpu.CompilerParams(
            dimension_semantics=("parallel",),
            # Explicit scoped-VMEM budget: safe on v5e/v6e (128 MiB physical)
            # and within v7x's 64 MiB physical VMEM.
            vmem_limit_bytes=48 * 1024 * 1024),
    )(x2d)


def _identity_copy(x: jax.Array) -> jax.Array:
    """Bounded, lane-dense identity copy of a (B, F) array."""
    B, F = x.shape
    total = B * F
    sub = max(8, 32 // max(jnp.dtype(x.dtype).itemsize, 1))

    if F % 128 == 0 and B % sub == 0:
        return _tiled_copy_2d(x)
    if total % 128 == 0:
        # Free row-major reshape to a lane-dense slab: keeps stores unmasked
        # and VMEM bounded regardless of B / F alignment.
        flat = jnp.reshape(x, (total // 128, 128))
        return jnp.reshape(_tiled_copy_2d(flat), (B, F))
    # Rare odd-sized case: pad the flat vector to a lane-dense slab so the
    # Pallas copy stays bounded; pad/slice are cheap XLA glue.
    pad = (-total) % 128
    flat = jnp.pad(jnp.reshape(x, (total,)), (0, pad))
    y = _tiled_copy_2d(jnp.reshape(flat, ((total + pad) // 128, 128)))
    return jnp.reshape(jnp.reshape(y, (total + pad,))[:total], (B, F))


# ----------------------------------------------------------------------------
# Dispatch: try the no-op once; if its lowering is unavailable fall back to copy.
# ----------------------------------------------------------------------------
_NOOP_OK = None


def _pallas_identity(x: jax.Array) -> jax.Array:
    global _NOOP_OK
    if _NOOP_OK is None:
        try:
            y = jax.block_until_ready(_alias_noop(x))
            _NOOP_OK = True
            return y
        except Exception:
            _NOOP_OK = False
    if _NOOP_OK:
        return _alias_noop(x)
    return _identity_copy(x)


class ReshapeLayer:
    """JAX/Pallas equivalent of the PyTorch ReshapeLayer."""

    def __init__(self, input_features: int, output_channels: int = 1):
        self.input_features = input_features
        self.output_channels = output_channels
        height, width = _most_square_factors(input_features)
        self.output_shape = (output_channels, height, width)
        print(
            f"ReshapeLayer: {input_features} -> {self.output_shape} "
            f"(total elements: {output_channels * height * width})"
        )

    def __call__(self, x: jax.Array) -> jax.Array:
        if x.shape[1] != self.input_features:
            raise ValueError(
                f"Expected {self.input_features} features, got {x.shape[1]}"
            )
        batch_size = x.shape[0]
        # TODO(synk): in production drop the pallas_call entirely — the whole
        # forward is jnp.reshape (metadata-only); the kernel only satisfies
        # the exercise and is reduced to a zero-traffic aliased no-op.
        y_flat = _pallas_identity(x)
        # Metadata-only reshape to NCHW, matching torch's x.view(B, C, H, W).
        return jnp.reshape(y_flat, (batch_size, *self.output_shape))


if __name__ == "__main__":
    # Case 1: F=128 -> (1, 8, 16), batch=2 (matches the module's intent).
    layer = ReshapeLayer(128, output_channels=1)
    x = jax.random.normal(jax.random.PRNGKey(0), (2, 128), dtype=jnp.float32)
    expected = jnp.reshape(x, (2, 1, 8, 16))
    y = jax.block_until_ready(layer(x))
    assert y.shape == (2, 1, 8, 16), y.shape
    assert y.dtype == x.dtype
    assert bool(jnp.array_equal(y, expected))

    # Case 2: sublane/lane-aligned shape (B=16, F=256 -> (1, 16, 16)).
    layer2 = ReshapeLayer(256, output_channels=1)
    x2 = jax.random.normal(jax.random.PRNGKey(0), (16, 256), dtype=jnp.float32)
    y2 = jax.block_until_ready(layer2(x2))
    assert y2.shape == (16, 1, 16, 16), y2.shape
    assert bool(jnp.array_equal(y2, jnp.reshape(x2, (16, 1, 16, 16))))

    # Case 3: feature count not a multiple of 128 (F=96 -> (1, 8, 12)).
    layer3 = ReshapeLayer(96, output_channels=1)
    x3 = jax.random.normal(jax.random.PRNGKey(0), (4, 96), dtype=jnp.float32)
    y3 = jax.block_until_ready(layer3(x3))
    assert y3.shape == (4, 1, 8, 12), y3.shape
    assert bool(jnp.array_equal(y3, jnp.reshape(x3, (4, 1, 8, 12))))

    print("KERNEL_OK")
</pallas_src>

<mosaic_0001>
module attributes {stable_mosaic.version = 11 : i64} {
  func.func @_noop_kernel(%arg0: memref<2x128xf32, #tpu.memory_space<any>>, %arg1: memref<2x128xf32, #tpu.memory_space<any>>) attributes {dimension_semantics = [], scalar_prefetch = 0 : i64, scratch_operands = 0 : i64, tpu.core_type = #tpu.core_type<tc>} {
    return
  }
}

module attributes {stable_mosaic.version = 11 : i64} {
  func.func @_copy_kernel(%arg0: i32, %arg1: memref<2x128xf32, #tpu.memory_space<vmem>>, %arg2: memref<2x128xf32, #tpu.memory_space<vmem>>) attributes {dimension_semantics = [#tpu.dimension_semantics<parallel>], iteration_bounds = array<i64: 1>, scalar_prefetch = 0 : i64, scratch_operands = 0 : i64, tpu.core_type = #tpu.core_type<tc>, window_params = [{transform_indices = @transform_0, window_bounds = array<i64: 2, 128>}, {transform_indices = @transform_1, window_bounds = array<i64: 2, 128>}]} {
    %c0 = arith.constant 0 : index
    %c0_0 = arith.constant 0 : index
    %0 = vector.load %arg1[%c0, %c0_0] : memref<2x128xf32, #tpu.memory_space<vmem>>, vector<2x128xf32>
    %c0_1 = arith.constant 0 : index
    %c0_2 = arith.constant 0 : index
    %1 = vector.load %arg2[%c0_1, %c0_2] : memref<2x128xf32, #tpu.memory_space<vmem>>, vector<2x128xf32>
    tpu.vector_store %arg2[%c0_1, %c0_2], %0 {strides = array<i32>} : memref<2x128xf32, #tpu.memory_space<vmem>>, vector<2x128xf32>,
    return
  }
  func.func @transform_0(%arg0: i32) -> (i32, i32) {
    %c0_i32 = arith.constant 0 : i32
    %c0_i32_0 = arith.constant 0 : i32
    return %arg0, %c0_i32 : i32, i32
  }
  func.func @transform_1(%arg0: i32) -> (i32, i32) {
    %c0_i32 = arith.constant 0 : i32
    %c0_i32_0 = arith.constant 0 : i32
    return %arg0, %c0_i32 : i32, i32
  }
}

</mosaic_0001>

<llo_original>
// kernel: tpu_custom_call.1
$region0: #{tpu_custom_call.1}
  #allocation0 [shape = 'u32[]', space=smem, size = 0x4, offset = 0x4, fixed_abs, tag = 'smem constant byte address 0x4 - core index']
  #allocation1 [shape = 'u32[144,128]{1,0:T(1,128)}', space=vmem, size = 0x12000, scoped, tag = 'internal scratch']
  %s0 = inlined_call_operand.hbm [shape: f32[2,128], index: 0, kind: input, shape index: {}, may-alias: {0,1}]
  %s1 = inlined_call_operand.hbm [shape: f32[2,128], index: 1, kind: output, shape index: {}, may-alias: {0,1}]
  %s2 = sld [smem:[#allocation0]]
  $region2: #{tpu_custom_call.1} parent=0
    _
  %s4 = ssub.s32 1, %s2
  %s5 = scalar_select 0, %s4, %s2

// kernel: tpu_custom_call.1
$region0: #{tpu_custom_call.1}
  #allocation0 [shape = 'u32[]', space=smem, size = 0x4, offset = 0x4, fixed_abs, tag = 'smem constant byte address 0x4 - core index']
  #allocation1 [shape = 'u32[144,128]{1,0:T(1,128)}', space=vmem, size = 0x12000, scoped, tag = 'internal scratch']
  %s0 = inlined_call_operand.hbm [shape: f32[2,128], index: 0, kind: input, shape index: {}]
  %s1 = inlined_call_operand.hbm [shape: f32[2,128], index: 1, kind: output, shape index: {}]
  %s2 = sld [smem:[#allocation0]]
  $region18: #{tpu_custom_call.1} parent=0
    _
  %s4 = ssub.s32 1, %s2
  %s5 = scalar_select 0, %s4, %s2
  $region1: #{tpu_custom_call.1} parent=0
    #allocation2 [shape = 'u8[1024]{0}', space=vmem, size = 0x400, scoped, tag = 'input window, operand 0, single buffered']
    #allocation3 [shape = 's32[1]{0}', space=sflag, size = 0x4, scoped, tag = 'scoped memory for tpu_custom_call.1']
    #allocation4 [shape = 's32[1]{0}', space=sflag, size = 0x4, scoped, tag = 'scoped memory for tpu_custom_call.1']
    #allocation5 [shape = 'u8[1024]{0}', space=vmem, size = 0x400, scoped, tag = 'output window, operand 0, single buffered']
    %6 = vsyncpa [#allocation3], 0
    %7 = vsyncpa [#allocation4], 0
    // Predicated region
    $region2: #{tpu_custom_call.1} parent=1 // pred_check
      _
    $region3: #{tpu_custom_call.1} parent=1 // pred_check_branch
      %9 = sbr.rel (0) target = $region5
    $region4: #{tpu_custom_call.1} parent=1 // pred_region
      %s11 = ssub.s32 32, 32
      %12 = vsyncadd [#allocation3], %s11
      %s14 = sshll.u32 [#allocation2], 4
      %s15 = int_to_ptr.vmem [resolvable:$true] %s14
      %17 = dma.hbm_to_vmem [thread:$0]  %s0, 32, %s15, [#allocation3]
    $region5: #{tpu_custom_call.1} parent=1 // pred_fallthru
      _
    // Predicated region
    $region6: #{tpu_custom_call.1} parent=1 // pred_check
      _
    $region7: #{tpu_custom_call.1} parent=1 // pred_check_branch
      %19 = sbr.rel (0) target = $region9
    $region8: #{tpu_custom_call.1} parent=1 // pred_region
      %20 = dma.done [#allocation3], 32
    $region9: #{tpu_custom_call.1} parent=1 // pred_fallthru
      _
    %v21 = vld [vmem:[#allocation2] sm:$0x3]
    %22 = vst [vmem:[#allocation5] sm:$0x3] %v21
    // Predicated region
    $region10: #{tpu_custom_call.1} parent=1 // pred_check
      _
    $region11: #{tpu_custom_call.1} parent=1 // pred_check_branch
      %24 = sbr.rel (0) target = $region13
    $region12: #{tpu_custom_call.1} parent=1 // pred_region
      %s26 = ssub.s32 32, 32
      %27 = vsyncadd [#allocation4], %s26
      %s29 = sshll.u32 [#allocation5], 4
      %s30 = int_to_ptr.vmem [resolvable:$true] %s29
      %32 = dma.vmem_to_hbm [thread:$0]  %s30, 32, %s1, [#allocation4]
    $region13: #{tpu_custom_call.1} parent=1 // pred_fallthru
      _
    // Predicated region
    $region14: #{tpu_custom_call.1} parent=1 // pred_check
      _
    $region15: #{tpu_custom_call.1} parent=1 // pred_check_branch
      %34 = sbr.rel (0) target = $region17
    $region16: #{tpu_custom_call.1} parent=1 // pred_region
      %35 = dma.done [#allocation4], 32
    $region17: #{tpu_custom_call.1} parent=1 // pred_fallthru
      _
    %36 = vsyncpa [#allocation3], 1
    %37 = vsyncpa [#allocation4], 1

</llo_original>
